<compile_context>
chip_gen: v7x
topology: tpu7x:2x2x1
jax: 0.10.0
libtpu: 0.0.40
codegen_flags: <defaults>
</compile_context>

<pallas_src>
import math

import jax
import jax.numpy as jnp
from jax import lax
from jax.experimental import pallas as pl
from jax.experimental.pallas import tpu as pltpu


# ----------------------------- kernels ---------------------------------------


def _mlp_kernel(x_ref, dinv_ref, w1_ref, b1_ref, w2_ref, b2_ref,
                feat_ref, rhs_ref):
    """feat = relu(relu(x W1 + b1) W2 + b2); rhs = bf16(dinv * feat) (prop RHS)."""
    f32 = jnp.float32
    h = jnp.maximum(
        jnp.dot(x_ref[...], w1_ref[...], preferred_element_type=f32) + b1_ref[...],
        0.0)
    feat = jnp.maximum(
        jnp.dot(h, w2_ref[...], preferred_element_type=f32) + b2_ref[...], 0.0)
    feat_ref[...] = feat
    rhs_ref[...] = (dinv_ref[...] * feat).astype(jnp.bfloat16)


def _prop1_kernel(a_ref, dinv_ref, feat_ref, rhs_ref, qf_ref, qf_rhs_ref):
    """Row block of Qf = 0.5*(feat - S feat), plus bf16(dinv * Qf) for prop #2.

    a_ref is a raw bf16 (bm, N) row block of A fed straight into the MXU; the
    D^-1/2 normalisation is a pre-scaled RHS + f32 post-scale (no A copies).
    """
    f32 = jnp.float32
    s_feat = dinv_ref[...] * jnp.dot(a_ref[...], rhs_ref[...],
                                     preferred_element_type=f32)
    qf = 0.5 * (feat_ref[...] - s_feat)
    qf_ref[...] = qf
    qf_rhs_ref[...] = (dinv_ref[...] * qf).astype(jnp.bfloat16)


def _prop2_out_kernel(a_ref, dinv_ref, feat_ref, qf_ref, qf_rhs_ref,
                      w3a_ref, w3b_ref, w3c_ref, b3_ref, w4_ref, b4_ref,
                      out_ref):
    """Second propagation (S Qf) + Bernstein combine + linear3(relu) + linear4."""
    f32 = jnp.float32
    s_qf = dinv_ref[...] * jnp.dot(a_ref[...], qf_rhs_ref[...],
                                   preferred_element_type=f32)
    feat = feat_ref[...]
    qf = qf_ref[...]
    half_q = 0.5 * qf
    half_sq = 0.5 * s_qf
    h0 = feat - half_q - half_sq          # k=0 branch of the reference
    h1 = 2.0 * qf * (feat - qf)           # k=1 branch: elementwise product, comb=2
    h2 = half_q - half_sq                 # k=2 branch

    # linear3 on cat([h0, h1, h2], -1) without the concat: three accumulated
    # (bm, H) @ (H, H) matmuls against the row-split W3 (avoids lane re-packing).
    h3 = (jnp.dot(h0, w3a_ref[...], preferred_element_type=f32)
          + jnp.dot(h1, w3b_ref[...], preferred_element_type=f32)
          + jnp.dot(h2, w3c_ref[...], preferred_element_type=f32)
          + b3_ref[...])
    h3 = jnp.maximum(h3, 0.0)

    # linear4 (no activation). Output columns are zero-padded to >=8 lanes.
    out_ref[...] = jnp.dot(h3, w4_ref[...], preferred_element_type=f32) + b4_ref[...]


# ----------------------------- wrapper ----------------------------------------


def _pick_row_block(n):
    """Largest row block that (a) divides N and (b) keeps the double-buffered
    bf16 A row block comfortably inside VMEM (<= ~8 MiB per buffer)."""
    budget_rows = max(8, (8 * 1024 * 1024) // max(2 * n, 1))
    target = min(512, budget_rows)
    if n <= target:
        return n
    for b in (512, 256, 128, 64, 32, 16, 8):
        if b <= target and n % b == 0:
            return b
    # TODO(synk): pad N to a multiple of 8 for ragged graphs instead of falling
    # back to a single VMEM-resident row block.
    return n


def bwgnn_forward(x, adjacency, params, dinv=None, *, block_rows=None):
    """BWGNN forward.

    x: (N, in_feats) f32 node features.
    adjacency: (N, N), A[v, u] = 1 for edge u -> v (cast to bf16 if needed).
    dinv: optional precomputed (N, 1) f32 = in_degrees().clamp(min=1) ** -0.5.
          Ideally supplied by the caller together with the graph; otherwise it is
          computed once here in the wrapper (outside the hot kernels).
    """
    f32 = jnp.float32
    N, in_feats = x.shape
    H = params["w2"].shape[1]
    C = params["w4"].shape[1]

    if adjacency.dtype != jnp.bfloat16:
        adjacency = adjacency.astype(jnp.bfloat16)

    if dinv is None:
        deg = jnp.sum(adjacency.astype(f32), axis=1, keepdims=True)
        dinv = lax.rsqrt(jnp.maximum(deg, 1.0))
    dinv = dinv.reshape(N, 1).astype(f32)

    # Row block size for streaming A.
    bm = int(block_rows) if block_rows is not None else _pick_row_block(N)
    if N % bm != 0 or (bm != N and bm % 8 != 0):
        bm = N
    n_blocks = N // bm

    # Split W3 into its three (H, H) row chunks; zero-pad the classifier to a
    # multiple of 8 output lanes (sliced back below) to avoid masked stores.
    w3 = params["w3"]
    w3a, w3b, w3c = w3[:H], w3[H:2 * H], w3[2 * H:]
    c_pad = max(8, ((C + 7) // 8) * 8)
    w4_p = jnp.pad(params["w4"], ((0, 0), (0, c_pad - C)))
    b4_p = jnp.pad(params["b4"], ((0, 0), (0, c_pad - C)))

    cp = pltpu.CompilerParams(
        dimension_semantics=("parallel",),      # megacore sharding on v7x
        # A is streamed in row blocks (never fully VMEM-resident), so this fits
        # v7x's 64 MiB physical VMEM with headroom and is plenty on v5e/v6e.
        vmem_limit_bytes=48 * 1024 * 1024)

    # --- call 1: node MLP -> feat (f32) and prescaled bf16 propagation RHS ------
    feat, rhs1 = pl.pallas_call(
        _mlp_kernel,
        out_shape=(jax.ShapeDtypeStruct((N, H), f32),
                   jax.ShapeDtypeStruct((N, H), jnp.bfloat16)),
        grid=(n_blocks,),
        in_specs=[pl.BlockSpec((bm, in_feats), lambda i: (i, 0)),
                  pl.BlockSpec((bm, 1), lambda i: (i, 0)),
                  pl.BlockSpec((in_feats, H), lambda i: (0, 0)),
                  pl.BlockSpec((1, H), lambda i: (0, 0)),
                  pl.BlockSpec((H, H), lambda i: (0, 0)),
                  pl.BlockSpec((1, H), lambda i: (0, 0))],
        out_specs=(pl.BlockSpec((bm, H), lambda i: (i, 0)),
                   pl.BlockSpec((bm, H), lambda i: (i, 0))),
        compiler_params=cp,
    )(x, dinv, params["w1"], params["b1"], params["w2"], params["b2"])

    # --- call 2: first propagation, row-block pipelined over A ------------------
    qf, qf_rhs = pl.pallas_call(
        _prop1_kernel,
        out_shape=(jax.ShapeDtypeStruct((N, H), f32),
                   jax.ShapeDtypeStruct((N, H), jnp.bfloat16)),
        grid=(n_blocks,),
        in_specs=[pl.BlockSpec((bm, N), lambda i: (i, 0)),   # A row block (bf16)
                  pl.BlockSpec((bm, 1), lambda i: (i, 0)),   # dinv rows
                  pl.BlockSpec((bm, H), lambda i: (i, 0)),   # feat rows
                  pl.BlockSpec((N, H), lambda i: (0, 0))],   # full bf16 RHS (resident)
        out_specs=(pl.BlockSpec((bm, H), lambda i: (i, 0)),
                   pl.BlockSpec((bm, H), lambda i: (i, 0))),
        compiler_params=cp,
    )(adjacency, dinv, feat, rhs1)

    # --- call 3: second propagation + Bernstein combine + linear3/linear4 -------
    out_pad = pl.pallas_call(
        _prop2_out_kernel,
        out_shape=jax.ShapeDtypeStruct((N, c_pad), f32),
        grid=(n_blocks,),
        in_specs=[pl.BlockSpec((bm, N), lambda i: (i, 0)),   # A row block (bf16)
                  pl.BlockSpec((bm, 1), lambda i: (i, 0)),   # dinv rows
                  pl.BlockSpec((bm, H), lambda i: (i, 0)),   # feat rows
                  pl.BlockSpec((bm, H), lambda i: (i, 0)),   # qf rows
                  pl.BlockSpec((N, H), lambda i: (0, 0)),    # full bf16 Qf RHS
                  pl.BlockSpec((H, H), lambda i: (0, 0)),    # w3a
                  pl.BlockSpec((H, H), lambda i: (0, 0)),    # w3b
                  pl.BlockSpec((H, H), lambda i: (0, 0)),    # w3c
                  pl.BlockSpec((1, H), lambda i: (0, 0)),    # b3
                  pl.BlockSpec((H, c_pad), lambda i: (0, 0)),
                  pl.BlockSpec((1, c_pad), lambda i: (0, 0))],
        out_specs=pl.BlockSpec((bm, c_pad), lambda i: (i, 0)),
        compiler_params=cp,
    )(adjacency, dinv, feat, qf, qf_rhs, w3a, w3b, w3c, params["b3"], w4_p, b4_p)

    return out_pad[:, :C]


# ----------------------------- reference & demo --------------------------------


def bwgnn_reference(x, adjacency, params):
    """Literal pure-JAX translation of the PyTorch forward (all f32)."""
    f32 = jnp.float32
    a = adjacency.astype(f32)
    deg = jnp.sum(a, axis=1, keepdims=True)
    dinv = lax.rsqrt(jnp.maximum(deg, 1.0))

    def unn_laplacian(g):
        return g - dinv * (a @ (dinv * g))

    h = jnp.maximum(x @ params["w1"] + params["b1"], 0.0)
    feat = jnp.maximum(h @ params["w2"] + params["b2"], 0.0)

    h0 = feat                              # k=0, n=2
    for _ in range(2):
        h0 = unn_laplacian(h0) / 2
        h0 = feat - h0
    h2 = feat                              # k=2, n=2
    for _ in range(2):
        h2 = unn_laplacian(h2) / 2
    temp = unn_laplacian(feat) / 2         # k=1, n=2
    h_part = feat - unn_laplacian(feat) / 2
    h1 = 2.0 * temp * h_part

    hcat = jnp.concatenate([h0, h1, h2], axis=-1)
    h3 = jnp.maximum(hcat @ params["w3"] + params["b3"], 0.0)
    return h3 @ params["w4"] + params["b4"]


def init_linear(key, fan_in, fan_out):
    # Deterministic nn.Linear-style init: U(-1/sqrt(fan_in), 1/sqrt(fan_in)).
    kw, kb = jax.random.split(key)
    bound = 1.0 / math.sqrt(fan_in)
    # Weights stored already transposed to (in, out) so kernels do x @ W.
    w = jax.random.uniform(kw, (fan_in, fan_out), jnp.float32, -bound, bound)
    b = jax.random.uniform(kb, (1, fan_out), jnp.float32, -bound, bound)
    return w, b


if __name__ == "__main__":
    key = jax.random.PRNGKey(0)
    N, IN_FEATS, H_FEATS, NUM_CLASSES = 64, 16, 32, 4

    kx, ka, k1, k2, k3, k4 = jax.random.split(key, 6)
    in_feat = jax.random.normal(kx, (N, IN_FEATS), jnp.float32)
    # Deterministic sparse random directed graph, A[v, u] = 1 means edge u -> v.
    adjacency = (jax.random.uniform(ka, (N, N)) < 0.1).astype(jnp.bfloat16)

    params = {}
    params["w1"], params["b1"] = init_linear(k1, IN_FEATS, H_FEATS)      # linear
    params["w2"], params["b2"] = init_linear(k2, H_FEATS, H_FEATS)       # linear2
    params["w3"], params["b3"] = init_linear(k3, 3 * H_FEATS, H_FEATS)   # linear3
    params["w4"], params["b4"] = init_linear(k4, H_FEATS, NUM_CLASSES)   # linear4

    # block_rows=32 exercises the multi-block, pipelined row-block grid even at
    # this tiny N (grid=(2,)); default block selection handles large graphs.
    out = bwgnn_forward(in_feat, adjacency, params, block_rows=32)
    out = jax.block_until_ready(out)
    assert out.shape == (N, NUM_CLASSES) and out.dtype == jnp.float32
    assert bool(jnp.all(jnp.isfinite(out)))

    ref = jax.block_until_ready(bwgnn_reference(in_feat, adjacency, params))
    err = float(jnp.max(jnp.abs(out - ref)))
    scale = float(jnp.max(jnp.abs(ref)))
    assert err <= 1e-2 + 1e-2 * scale, f"max abs err {err} vs ref scale {scale}"

    print("KERNEL_OK")
</pallas_src>

<mosaic_0001>
module attributes {stable_mosaic.version = 11 : i64} {
  func.func @_mlp_kernel(%arg0: i32, %arg1: memref<32x16xf32, #tpu.memory_space<vmem>>, %arg2: memref<32x1xf32, #tpu.memory_space<vmem>>, %arg3: memref<16x32xf32, #tpu.memory_space<vmem>>, %arg4: memref<1x32xf32, #tpu.memory_space<vmem>>, %arg5: memref<32x32xf32, #tpu.memory_space<vmem>>, %arg6: memref<1x32xf32, #tpu.memory_space<vmem>>, %arg7: memref<32x32xf32, #tpu.memory_space<vmem>>, %arg8: memref<32x32xbf16, #tpu.memory_space<vmem>>) attributes {dimension_semantics = [#tpu.dimension_semantics<parallel>], iteration_bounds = array<i64: 2>, scalar_prefetch = 0 : i64, scratch_operands = 0 : i64, tpu.core_type = #tpu.core_type<tc>, window_params = [{transform_indices = @transform_0, window_bounds = array<i64: 32, 16>}, {transform_indices = @transform_1, window_bounds = array<i64: 32, 1>}, {pipeline_mode = #tpu.pipeline_mode<synchronous>, transform_indices = @transform_2, window_bounds = array<i64: 16, 32>}, {pipeline_mode = #tpu.pipeline_mode<synchronous>, transform_indices = @transform_3, window_bounds = array<i64: 1, 32>}, {pipeline_mode = #tpu.pipeline_mode<synchronous>, transform_indices = @transform_4, window_bounds = array<i64: 32, 32>}, {pipeline_mode = #tpu.pipeline_mode<synchronous>, transform_indices = @transform_5, window_bounds = array<i64: 1, 32>}, {transform_indices = @transform_6, window_bounds = array<i64: 32, 32>}, {transform_indices = @transform_7, window_bounds = array<i64: 32, 32>}]} {
    %c0 = arith.constant 0 : index
    %c0_0 = arith.constant 0 : index
    %0 = vector.load %arg1[%c0, %c0_0] : memref<32x16xf32, #tpu.memory_space<vmem>>, vector<32x16xf32>
    %c0_1 = arith.constant 0 : index
    %c0_2 = arith.constant 0 : index
    %1 = vector.load %arg3[%c0_1, %c0_2] : memref<16x32xf32, #tpu.memory_space<vmem>>, vector<16x32xf32>
    %cst = arith.constant dense<0.000000e+00> : vector<32x32xf32>
    %2 = tpu.matmul %0, %1, %cst {dimension_numbers = #tpu.dot_dimension_numbers<[1], [0], [0], [1], [0, 0, 1, 1], [], []>} : vector<32x16xf32>, vector<16x32xf32>, vector<32x32xf32> -> vector<32x32xf32>
    %c0_3 = arith.constant 0 : index
    %c0_4 = arith.constant 0 : index
    %3 = vector.load %arg4[%c0_3, %c0_4] : memref<1x32xf32, #tpu.memory_space<vmem>>, vector<1x32xf32>
    %4 = vector.broadcast %3 : vector<1x32xf32> to vector<32x32xf32>
    %5 = arith.addf %2, %4 : vector<32x32xf32>
    %cst_5 = arith.constant 0.000000e+00 : f32
    %6 = vector.broadcast %cst_5 : f32 to vector<32x32xf32>
    %7 = arith.maximumf %5, %6 : vector<32x32xf32>
    %c0_6 = arith.constant 0 : index
    %c0_7 = arith.constant 0 : index
    %8 = vector.load %arg5[%c0_6, %c0_7] : memref<32x32xf32, #tpu.memory_space<vmem>>, vector<32x32xf32>
    %cst_8 = arith.constant dense<0.000000e+00> : vector<32x32xf32>
    %9 = tpu.matmul %7, %8, %cst_8 {dimension_numbers = #tpu.dot_dimension_numbers<[1], [0], [0], [1], [0, 0, 1, 1], [], []>} : vector<32x32xf32>, vector<32x32xf32>, vector<32x32xf32> -> vector<32x32xf32>
    %c0_9 = arith.constant 0 : index
    %c0_10 = arith.constant 0 : index
    %10 = vector.load %arg6[%c0_9, %c0_10] : memref<1x32xf32, #tpu.memory_space<vmem>>, vector<1x32xf32>
    %11 = vector.broadcast %10 : vector<1x32xf32> to vector<32x32xf32>
    %12 = arith.addf %9, %11 : vector<32x32xf32>
    %cst_11 = arith.constant 0.000000e+00 : f32
    %13 = vector.broadcast %cst_11 : f32 to vector<32x32xf32>
    %14 = arith.maximumf %12, %13 : vector<32x32xf32>
    %c0_12 = arith.constant 0 : index
    %c0_13 = arith.constant 0 : index
    %15 = vector.load %arg7[%c0_12, %c0_13] : memref<32x32xf32, #tpu.memory_space<vmem>>, vector<32x32xf32>
    tpu.vector_store %arg7[%c0_12, %c0_13], %14 {strides = array<i32>} : memref<32x32xf32, #tpu.memory_space<vmem>>, vector<32x32xf32>,
    %c0_14 = arith.constant 0 : index
    %c0_15 = arith.constant 0 : index
    %16 = vector.load %arg2[%c0_14, %c0_15] : memref<32x1xf32, #tpu.memory_space<vmem>>, vector<32x1xf32>
    %17 = vector.broadcast %16 : vector<32x1xf32> to vector<32x32xf32>
    %18 = arith.mulf %17, %14 : vector<32x32xf32>
    %19 = arith.truncf %18 : vector<32x32xf32> to vector<32x32xbf16>
    %c0_16 = arith.constant 0 : index
    %c0_17 = arith.constant 0 : index
    %20 = vector.load %arg8[%c0_16, %c0_17] : memref<32x32xbf16, #tpu.memory_space<vmem>>, vector<32x32xbf16>
    tpu.vector_store %arg8[%c0_16, %c0_17], %19 {strides = array<i32>} : memref<32x32xbf16, #tpu.memory_space<vmem>>, vector<32x32xbf16>,
    return
  }
  func.func @transform_0(%arg0: i32) -> (i32, i32) {
    %c0_i32 = arith.constant 0 : i32
    %c0_i32_0 = arith.constant 0 : i32
    return %arg0, %c0_i32 : i32, i32
  }
  func.func @transform_1(%arg0: i32) -> (i32, i32) {
    %c0_i32 = arith.constant 0 : i32
    %c0_i32_0 = arith.constant 0 : i32
    return %arg0, %c0_i32 : i32, i32
  }
  func.func @transform_2(%arg0: i32) -> (i32, i32) {
    %c0_i32 = arith.constant 0 : i32
    %c0_i32_0 = arith.constant 0 : i32
    %c0_i32_1 = arith.constant 0 : i32
    return %c0_i32, %c0_i32_0 : i32, i32
  }
  func.func @transform_3(%arg0: i32) -> (i32, i32) {
    %c0_i32 = arith.constant 0 : i32
    %c0_i32_0 = arith.constant 0 : i32
    %c0_i32_1 = arith.constant 0 : i32
    return %c0_i32, %c0_i32_0 : i32, i32
  }
  func.func @transform_4(%arg0: i32) -> (i32, i32) {
    %c0_i32 = arith.constant 0 : i32
    %c0_i32_0 = arith.constant 0 : i32
    %c0_i32_1 = arith.constant 0 : i32
    return %c0_i32, %c0_i32_0 : i32, i32
  }
  func.func @transform_5(%arg0: i32) -> (i32, i32) {
    %c0_i32 = arith.constant 0 : i32
    %c0_i32_0 = arith.constant 0 : i32
    %c0_i32_1 = arith.constant 0 : i32
    return %c0_i32, %c0_i32_0 : i32, i32
  }
  func.func @transform_6(%arg0: i32) -> (i32, i32) {
    %c0_i32 = arith.constant 0 : i32
    %c0_i32_0 = arith.constant 0 : i32
    return %arg0, %c0_i32 : i32, i32
  }
  func.func @transform_7(%arg0: i32) -> (i32, i32) {
    %c0_i32 = arith.constant 0 : i32
    %c0_i32_0 = arith.constant 0 : i32
    return %arg0, %c0_i32 : i32, i32
  }
}

</mosaic_0001>

<llo_original>
// kernel: tpu_custom_call.1
$region0: #{tpu_custom_call.1}
  #allocation0 [shape = 'u32[]', space=smem, size = 0x4, offset = 0x4, fixed_abs, tag = 'smem constant byte address 0x4 - core index']
  #allocation1 [shape = 'u32[144,128]{1,0:T(1,128)}', space=vmem, size = 0x12000, scoped, tag = 'internal scratch']
  %s0 = inlined_call_operand.vmem [shape: f32[64,16], index: 0, kind: input, shape index: {}]
  %s1 = inlined_call_operand.vmem [shape: f32[64,1], index: 1, kind: input, shape index: {}]
  %s2 = inlined_call_operand.vmem [shape: f32[16,32], index: 2, kind: input, shape index: {}]
  %s3 = inlined_call_operand.vmem [shape: f32[1,32], index: 3, kind: input, shape index: {}]
  %s4 = inlined_call_operand.vmem [shape: f32[32,32], index: 4, kind: input, shape index: {}]
  %s5 = inlined_call_operand.vmem [shape: f32[1,32], index: 5, kind: input, shape index: {}]
  %s6 = inlined_call_operand.vmem [shape: f32[64,32], index: 6, kind: output, shape index: {0}]
  %s7 = inlined_call_operand.vmem [shape: bf16[64,32], index: 7, kind: output, shape index: {1}]
  %8 = xla_tuple %s6, %s7
  %s9 = sld [smem:[#allocation0]]
  $region65: #{tpu_custom_call.1} parent=0
    _
  %s11 = ssub.s32 1, %s9
  %s12 = scalar_select 0, %s11, %s9
  loop: start=0, step=1, limit=4
  $region2: #{tpu_custom_call.1} parent=0 // loop_pre_header
    _
  $region3: #{tpu_custom_call.1} parent=0 // loop_header
    %s14 = sphi 0, %s18
    %p15 = scmp.ge.s32.totalorder %s14, 4
    %s24 = sphi 0, %s26
    %s27 = sphi 0, %s24
    %s28 = sphi 0, %s27
    %s44 = sphi 0, %s28
    %s50 = sphi 0, %s52
    %s53 = sphi 0, %s50
    %s54 = sphi 0, %s53
    %s70 = sphi 0, %s54
    %s74 = sphi 0, %s74
    %s76 = sphi 0, %s74
    %s77 = sphi 0, %s76
    %s91 = sphi 0, %s77
    %s95 = sphi 0, %s95
    %s97 = sphi 0, %s95
    %s98 = sphi 0, %s97
    %s112 = sphi 0, %s98
    %s116 = sphi 0, %s116
    %s118 = sphi 0, %s116
    %s119 = sphi 0, %s118
    %s133 = sphi 0, %s119
    %s137 = sphi 0, %s137
    %s139 = sphi 0, %s137
    %s140 = sphi 0, %s139
    %s154 = sphi 0, %s140
    %s160 = sphi 0, %s162
    %s163 = sphi 0, %s160
    %s164 = sphi 0, %s163
    %s180 = sphi 0, %s164
    %s186 = sphi 0, %s188
    %s189 = sphi 0, %s186
    %s190 = sphi 0, %s189
    %s206 = sphi 0, %s190
  $region4: #{tpu_custom_call.1} parent=0 // loop_header_branch
    %17 = sbr.rel (%p15) target = $region8
  $region5: #{tpu_custom_call.1} parent=0 // loop_body
    %s19 = ssub.s32 %s14, 1
    %s20 = ssub.s32 %s14, 2
    %s21 = sadd.s32 %s14, 1
    %s22 = ssub.s32 %s14, %s21
    %p23 = scmp.eq.s32.totalorder %s22, 0
    %s25 = sadd.s32 %s24, 1
    %s26 = scalar_select %p23, %s24, %s25
    %p29 = pneg %p23
    %p30 = scmp.eq.s32.totalorder %s14, 1
    %p31 = por %p29, %p30
    %p32 = scmp.ne.s32.totalorder %s24, %s27
    %p33 = scmp.eq.s32.totalorder %s14, 0
    %p34 = por %p32, %p33
    %p35 = scmp.ne.s32.totalorder %s24, %s27
    %p36 = scmp.eq.s32.totalorder %s19, 1
    %p37 = por %p35, %p36
    %p38 = scmp.ne.s32.totalorder %s27, %s28
    %p39 = scmp.eq.s32.totalorder %s19, 0
    %p40 = por %p38, %p39
    %p41 = scmp.ne.s32.totalorder %s27, %s28
    %p42 = scmp.eq.s32.totalorder %s20, 1
    %p43 = por %p41, %p42
    %p45 = scmp.ne.s32.totalorder %s28, %s44
    %p46 = scmp.eq.s32.totalorder %s20, 0
    %p47 = por %p45, %p46
    %s48 = ssub.s32 %s14, %s21
    %p49 = scmp.eq.s32.totalorder %s48, 0
    %s51 = sadd.s32 %s50, 1
    %s52 = scalar_select %p49, %s50, %s51
    %p55 = pneg %p49
    %p56 = scmp.eq.s32.totalorder %s14, 1
    %p57 = por %p55, %p56
    %p58 = scmp.ne.s32.totalorder %s50, %s53
    %p59 = scmp.eq.s32.totalorder %s14, 0
    %p60 = por %p58, %p59
    %p61 = scmp.ne.s32.totalorder %s50, %s53
    %p62 = scmp.eq.s32.totalorder %s19, 1
    %p63 = por %p61, %p62
    %p64 = scmp.ne.s32.totalorder %s53, %s54
    %p65 = scmp.eq.s32.totalorder %s19, 0
    %p66 = por %p64, %p65
    %p67 = scmp.ne.s32.totalorder %s53, %s54
    %p68 = scmp.eq.s32.totalorder %s20, 1
    %p69 = por %p67, %p68
    %p71 = scmp.ne.s32.totalorder %s54, %s70
    %p72 = scmp.eq.s32.totalorder %s20, 0
    %p73 = por %p71, %p72
    %s75 = sadd.s32 %s74, 1
    %p78 = scmp.eq.s32.totalorder %s14, 1
    %p79 = scmp.ne.s32.totalorder %s74, %s76
    %p80 = scmp.eq.s32.totalorder %s14, 0
    %p81 = por %p79, %p80
    %p82 = scmp.ne.s32.totalorder %s74, %s76
    %p83 = scmp.eq.s32.totalorder %s19, 1
    %p84 = por %p82, %p83
    %p85 = scmp.ne.s32.totalorder %s76, %s77
    %p86 = scmp.eq.s32.totalorder %s19, 0
    %p87 = por %p85, %p86
    %p88 = scmp.ne.s32.totalorder %s76, %s77
    %p89 = scmp.eq.s32.totalorder %s20, 1
    %p90 = por %p88, %p89
    %p92 = scmp.ne.s32.totalorder %s77, %s91
    %p93 = scmp.eq.s32.totalorder %s20, 0
    %p94 = por %p92, %p93
    %s96 = sadd.s32 %s95, 1
    %p99 = scmp.eq.s32.totalorder %s14, 1
    %p100 = scmp.ne.s32.totalorder %s95, %s97
    %p101 = scmp.eq.s32.totalorder %s14, 0
    %p102 = por %p100, %p101
    %p103 = scmp.ne.s32.totalorder %s95, %s97
    %p104 = scmp.eq.s32.totalorder %s19, 1
    %p105 = por %p103, %p104
    %p106 = scmp.ne.s32.totalorder %s97, %s98
    %p107 = scmp.eq.s32.totalorder %s19, 0
    %p108 = por %p106, %p107
    %p109 = scmp.ne.s32.totalorder %s97, %s98
    %p110 = scmp.eq.s32.totalorder %s20, 1
    %p111 = por %p109, %p110
    %p113 = scmp.ne.s32.totalorder %s98, %s112
    %p114 = scmp.eq.s32.totalorder %s20, 0
    %p115 = por %p113, %p114
    %s117 = sadd.s32 %s116, 1
    %p120 = scmp.eq.s32.totalorder %s14, 1
    %p121 = scmp.ne.s32.totalorder %s116, %s118
    %p122 = scmp.eq.s32.totalorder %s14, 0
    %p123 = por %p121, %p122
    %p124 = scmp.ne.s32.totalorder %s116, %s118
    %p125 = scmp.eq.s32.totalorder %s19, 1
    %p126 = por %p124, %p125
    %p127 = scmp.ne.s32.totalorder %s118, %s119
    %p128 = scmp.eq.s32.totalorder %s19, 0
    %p129 = por %p127, %p128
    %p130 = scmp.ne.s32.totalorder %s118, %s119
    %p131 = scmp.eq.s32.totalorder %s20, 1
    %p132 = por %p130, %p131
    %p134 = scmp.ne.s32.totalorder %s119, %s133
    %p135 = scmp.eq.s32.totalorder %s20, 0
    %p136 = por %p134, %p135
    %s138 = sadd.s32 %s137, 1
    %p141 = scmp.eq.s32.totalorder %s14, 1
    %p142 = scmp.ne.s32.totalorder %s137, %s139
    %p143 = scmp.eq.s32.totalorder %s14, 0
    %p144 = por %p142, %p143
    %p145 = scmp.ne.s32.totalorder %s137, %s139
    %p146 = scmp.eq.s32.totalorder %s19, 1
    %p147 = por %p145, %p146
    %p148 = scmp.ne.s32.totalorder %s139, %s140
    %p149 = scmp.eq.s32.totalorder %s19, 0
    %p150 = por %p148, %p149
    %p151 = scmp.ne.s32.totalorder %s139, %s140
    %p152 = scmp.eq.s32.totalorder %s20, 1
    %p153 = por %p151, %p152
    %p155 = scmp.ne.s32.totalorder %s140, %s154
    %p156 = scmp.eq.s32.totalorder %s20, 0
    %p157 = por %p155, %p156
    %s158 = ssub.s32 %s14, %s21
    %p159 = scmp.eq.s32.totalorder %s158, 0
    %s161 = sadd.s32 %s160, 1
    %s162 = scalar_select %p159, %s160, %s161
    %p165 = pneg %p159
    %p166 = scmp.eq.s32.totalorder %s14, 1
    %p167 = por %p165, %p166
    %p168 = scmp.ne.s32.totalorder %s160, %s163
    %p169 = scmp.eq.s32.totalorder %s14, 0
    %p170 = por %p168, %p169
    %p171 = scmp.ne.s32.totalorder %s160, %s163
    %p172 = scmp.eq.s32.totalorder %s19, 1
    %p173 = por %p171, %p172
    %p174 = scmp.ne.s32.totalorder %s163, %s164
    %p175 = scmp.eq.s32.totalorder %s19, 0
    %p176 = por %p174, %p175
    %p177 = scmp.ne.s32.totalorder %s163, %s164
    %p178 = scmp.eq.s32.totalorder %s20, 1
    %p179 = por %p177, %p178
    %p181 = scmp.ne.s32.totalorder %s164, %s180
    %p182 = scmp.eq.s32.totalorder %s20, 0
    %p183 = por %p181, %p182
    %s184 = ssub.s32 %s14, %s21
    %p185 = scmp.eq.s32.totalorder %s184, 0
    %s187 = sadd.s32 %s186, 1
    %s188 = scalar_select %p185, %s186, %s187
    %p191 = pneg %p185
    %p192 = scmp.eq.s32.totalorder %s14, 1
    %p193 = por %p191, %p192
    %p194 = scmp.ne.s32.totalorder %s186, %s189
    %p195 = scmp.eq.s32.totalorder %s14, 0
    %p196 = por %p194, %p195
    %p197 = scmp.ne.s32.totalorder %s186, %s189
    %p198 = scmp.eq.s32.totalorder %s19, 1
    %p199 = por %p197, %p198
    %p200 = scmp.ne.s32.totalorder %s189, %s190
    %p201 = scmp.eq.s32.totalorder %s19, 0
    %p202 = por %p200, %p201
    %p203 = scmp.ne.s32.totalorder %s189, %s190
    %p204 = scmp.eq.s32.totalorder %s20, 1
    %p205 = por %p203, %p204
    %p207 = scmp.ne.s32.totalorder %s190, %s206
    %p208 = scmp.eq.s32.totalorder %s20, 0
    %p209 = por %p207, %p208
    %p210 = scmp.le.s32.totalorder 1, %s14
    %p211 = scmp.lt.s32.totalorder %s14, 3
    %p212 = pnand %p210, %p211
    %p213 = pneg %p212
    // Predicated region
    $region9: #{tpu_custom_call.1} parent=5 // pred_check
      _
    $region10: #{tpu_custom_call.1} parent=5 // pred_check_branch
      %215 = sbr.rel (%p212) target = $region12
    $region11: #{tpu_custom_call.1} parent=5 // pred_region
      %s216 = ssub.s32 %s14, 1
      // Predicated region
      $region13: #{tpu_custom_call.1} parent=11 // pred_check
        %p217 = pneg %p87
      $region14: #{tpu_custom_call.1} parent=11 // pred_check_branch
        %219 = sbr.rel (%p217) target = $region16
      $region15: #{tpu_custom_call.1} parent=11 // pred_region
        _
      $region16: #{tpu_custom_call.1} parent=11 // pred_fallthru
        _
      // Predicated region
      $region17: #{tpu_custom_call.1} parent=11 // pred_check
        %p220 = pneg %p108
      $region18: #{tpu_custom_call.1} parent=11 // pred_check_branch
        %222 = sbr.rel (%p220) target = $region20
      $region19: #{tpu_custom_call.1} parent=11 // pred_region
        _
      $region20: #{tpu_custom_call.1} parent=11 // pred_fallthru
        _
      // Predicated region
      $region21: #{tpu_custom_call.1} parent=11 // pred_check
        %p223 = pneg %p129
      $region22: #{tpu_custom_call.1} parent=11 // pred_check_branch
        %225 = sbr.rel (%p223) target = $region24
      $region23: #{tpu_custom_call.1} parent=11 // pred_region
        _
      $region24: #{tpu_custom_call.1} parent=11 // pred_fallthru
        _
      // Predicated region
      $region25: #{tpu_custom_call.1} parent=11 // pred_check
        %p226 = pneg %p150
      $region26: #{tpu_custom_call.1} parent=11 // pred_check_branch
        %228 = sbr.rel (%p226) target = $region28
      $region27: #{tpu_custom_call.1} parent=11 // pred_region
        _
      $region28: #{tpu_custom_call.1} parent=11 // pred_fallthru
        _
    $region12: #{tpu_custom_call.1} parent=5 // pred_fallthru
      _
    %p229 = scmp.lt.s32.totalorder %s14, 2
    // Predicated region
    $region29: #{tpu_custom_call.1} parent=5 // pred_check
      %p230 = pneg %p229
    $region30: #{tpu_custom_call.1} parent=5 // pred_check_branch
      %232 = sbr.rel (%p230) target = $region32
    $region31: #{tpu_custom_call.1} parent=5 // pred_region
      // Predicated region
      $region33: #{tpu_custom_call.1} parent=31 // pred_check
        %p233 = pneg %p34
      $region34: #{tpu_custom_call.1} parent=31 // pred_check_branch
        %235 = sbr.rel (%p233) target = $region36
      $region35: #{tpu_custom_call.1} parent=31 // pred_region
        %s236 = smul.u32 4, %s14
        %p237 = scmp.lt.s32.totalorder %s236, 7
        %s238 = scalar_select %p237, %s236, 7
        %s239 = smul.addr %s238, 8
        %s240 = scalar_lea.vmem %s0, %s239
        %s241 = smul.u32 4, %s14
      $region36: #{tpu_custom_call.1} parent=31 // pred_fallthru
        _
      // Predicated region
      $region37: #{tpu_custom_call.1} parent=31 // pred_check
        %p242 = pneg %p60
      $region38: #{tpu_custom_call.1} parent=31 // pred_check_branch
        %244 = sbr.rel (%p242) target = $region40
      $region39: #{tpu_custom_call.1} parent=31 // pred_region
        %s245 = smul.u32 4, %s14
        %p246 = scmp.lt.s32.totalorder %s245, 7
        %s247 = scalar_select %p246, %s245, 7
        %s248 = smul.addr %s247, 8
        %s249 = scalar_lea.vmem %s1, %s248
        %s250 = smul.u32 4, %s14
      $region40: #{tpu_custom_call.1} parent=31 // pred_fallthru
        _
    $region32: #{tpu_custom_call.1} parent=5 // pred_fallthru
      _
    %p251 = scmp.le.s32.totalorder 1, %s14
    %p252 = scmp.lt.s32.totalorder %s14, 3
    %p253 = pnand %p251, %p252
    %p254 = pneg %p253
    // Predicated region
    $region41: #{tpu_custom_call.1} parent=5 // pred_check
      _
    $region42: #{tpu_custom_call.1} parent=5 // pred_check_branch
      %256 = sbr.rel (%p253) target = $region44
    $region43: #{tpu_custom_call.1} parent=5 // pred_region
      %s257 = ssub.s32 %s14, 1
      %s258 = smul.u32 4, %s19
      %p259 = scmp.lt.s32.totalorder %s258, 7
      %s260 = scalar_select %p259, %s258, 7
      %s261 = smul.addr %s260, 8
      %s262 = scalar_lea.vmem %s0, %s261
      %p263 = pneg %p40
      %p264 = pneg %p37
      %s265 = smul.u32 4, %s19
      %p266 = scmp.lt.s32.totalorder %s265, 7
      %s267 = scalar_select %p266, %s265, 7
      %s268 = smul.addr %s267, 8
      %s269 = scalar_lea.vmem %s1, %s268
      %p270 = pneg %p66
      %p271 = pneg %p63
      %p272 = pneg %p87
      %p273 = pneg %p84
      %p274 = pneg %p108
      %p275 = pneg %p105
      %p276 = pneg %p129
      %p277 = pneg %p126
      %p278 = pneg %p150
      %p279 = pneg %p147
      %p280 = pneg %p176
      %p281 = pneg %p173
      %s282 = smul.u32 4, %s19
      %p283 = scmp.lt.s32.totalorder %s282, 7
      %s284 = scalar_select %p283, %s282, 7
      %s285 = smul.addr %s284, 8
      %s286 = scalar_lea.vmem %s6, %s285
      %p287 = pneg %p202
      %p288 = pneg %p199
      %s289 = smul.u32 4, %s19
      %p290 = scmp.lt.s32.totalorder %s289, 7
      %s291 = scalar_select %p290, %s289, 7
      %s292 = smul.addr %s291, 4
      %s293 = scalar_lea.vmem %s7, %s292
      %s294 = smul.u32 4, %s19
      %p295 = scmp.lt.s32.totalorder %s294, 7
      %s296 = scalar_select %p295, %s294, 7
      %s297 = smul.addr %s296, 8
      %s298 = scalar_lea.vmem %s0, %s297
      %s299 = smul.u32 4, %s19
      %s300 = smul.u32 4, %s19
      %p301 = scmp.lt.s32.totalorder %s300, 7
      %s302 = scalar_select %p301, %s300, 7
      %s303 = smul.addr %s302, 8
      %s304 = scalar_lea.vmem %s1, %s303
      %s305 = smul.u32 4, %s19
      %s306 = smul.u32 4, %s19
      %p307 = scmp.lt.s32.totalorder %s306, 7
      %s308 = scalar_select %p307, %s306, 7
      %s309 = smul.addr %s308, 8
      %s310 = scalar_lea.vmem %s6, %s309
      %s311 = smul.u32 4, %s19
      %s312 = smul.u32 4, %s19
      %p313 = scmp.lt.s32.totalorder %s312, 7
      %s314 = scalar_select %p313, %s312, 7
      %s315 = smul.addr %s314, 4
      %s316 = scalar_lea.vmem %s7, %s315
      %s317 = smul.u32 4, %s19
      %v318 = vld [vmem:[%s298] sm:$0xff]
      %v319 = vld [vmem:[%s298 + $0x8] sm:$0xff]
      %v320 = vld [vmem:[%s298 + $0x10] sm:$0xff]
      %v321 = vld [vmem:[%s298 + $0x18] sm:$0xff]
      %v322 = vld [vmem:[%s2] sm:$0xff]
      %v323 = vld [vmem:[%s2 + $0x8] sm:$0xff]
      %v324 = vld [vmem:[%s3] sm:$0x1]
      %v326 = vlaneseq
      %v327 = vshrl.u32 %v326, 7
      %v328 = vsub.s32 0, %v327
      %v329 = vrot.slane %v324, %v328
      %vm331 = vcmask 130048
      %v333 = vsel %vm331, %v318, 0
      %v336 = vsel %vm331, %v319, 0
      %v339 = vsel %vm331, %v320, 0
      %v342 = vsel %vm331, %v321, 0
      %344 = vmatprep.subr.mxu0 0.0
      %345 = vmatpush1.msra.mxu0 %v322
      %346 = vmatprep.subr.mxu0 0.0
      %347 = vmatpush1.msra.mxu0 %v323
      %348 = vmatprep.subr.mxu0 0.0
      %349 = vmatpush1.msra.mxu0 0.0
      %350 = vmatprep.subr.mxu0 0.0
      %351 = vmatpush1.msra.mxu0 0.0
      %352 = vmatprep.subr.mxu0 0.0
      %353 = vmatpush1.msra.mxu0 0.0
      %354 = vmatprep.subr.mxu0 0.0
      %355 = vmatpush1.msra.mxu0 0.0
      %356 = vmatprep.subr.mxu0 0.0
      %357 = vmatpush1.msra.mxu0 0.0
      %358 = vmatprep.subr.mxu0 0.0
      %359 = vmatpush1.msra.mxu0 0.0
      %360 = vmatprep.subr.mxu0 0.0
      %361 = vmatpush1.msra.mxu0 0.0
      %362 = vmatprep.subr.mxu0 0.0
      %363 = vmatpush1.msra.mxu0 0.0
      %364 = vmatprep.subr.mxu0 0.0
      %365 = vmatpush1.msra.mxu0 0.0
      %366 = vmatprep.subr.mxu0 0.0
      %367 = vmatpush1.msra.mxu0 0.0
      %368 = vmatprep.subr.mxu0 0.0
      %369 = vmatpush1.msra.mxu0 0.0
      %370 = vmatprep.subr.mxu0 0.0
      %371 = vmatpush1.msra.mxu0 0.0
      %372 = vmatprep.subr.mxu0 0.0
      %373 = vmatpush1.msra.mxu0 0.0
      %374 = vmatprep.subr.mxu0 0.0
      %375 = vmatpush1.msra.mxu0 0.0
      %376 = vmatprep.subr.mxu0 0.0
      %377 = vmatpush1.msra.mxu0 0.0
      %378 = vmatprep.subr.mxu0 0.0
      %379 = vmatpush1.msra.mxu0 0.0
      %380 = vmatprep.subr.mxu0 0.0
      %381 = vmatpush1.msra.mxu0 0.0
      %382 = vmatprep.subr.mxu0 0.0
      %383 = vmatpush1.msra.mxu0 0.0
      %384 = vmatprep.subr.mxu0 0.0
      %385 = vmatpush1.msra.mxu0 0.0
      %386 = vmatprep.subr.mxu0 0.0
      %387 = vmatpush1.msra.mxu0 0.0
      %388 = vmatprep.subr.mxu0 0.0
      %389 = vmatpush1.msra.mxu0 0.0
      %390 = vmatprep.subr.mxu0 0.0
      %391 = vmatpush1.msra.mxu0 0.0
      %392 = vmatprep.subr.mxu0 0.0
      %393 = vmatpush1.msra.mxu0 0.0
      %394 = vmatprep.subr.mxu0 0.0
      %395 = vmatpush1.msra.mxu0 0.0
      %396 = vmatprep.subr.mxu0 0.0
      %397 = vmatpush1.msra.mxu0 0.0
      %398 = vmatprep.subr.mxu0 0.0
      %399 = vmatpush1.msra.mxu0 0.0
      %400 = vmatprep.subr.mxu0 0.0
      %401 = vmatpush1.msra.mxu0 0.0
      %402 = vmatprep.subr.mxu0 0.0
      %403 = vmatpush1.msra.mxu0 0.0
      %404 = vmatprep.subr.mxu0 0.0
      %405 = vmatpush1.msra.mxu0 0.0
      %406 = vmatprep.subr.mxu0 0.0
      %407 = vmatpush1.msra.mxu0 0.0
      %408 = vmatprep.mubr.f32.mxu0 0.0
      %409 = vmatmul.mubr.f32.gmra.mrb[0].mxu0 %v333
      %v410 = vpop.f32.mrb[0].mxu0
      %v411 = vadd.f32 %v329, %v410
      %v412 = vpop.f32.mrb[0].mxu0
      %413 = vmatprep.mubr.f32.mxu0 0.0
      %414 = vmatmul.mubr.f32.gmra.mrb[0].mxu0 %v336
      %v415 = vpop.f32.mrb[0].mxu0
      %v416 = vadd.f32 %v329, %v415
      %v417 = vpop.f32.mrb[0].mxu0
      %418 = vmatprep.mubr.f32.mxu0 0.0
      %419 = vmatmul.mubr.f32.gmra.mrb[0].mxu0 %v339
      %v420 = vpop.f32.mrb[0].mxu0
      %v421 = vadd.f32 %v329, %v420
      %v422 = vpop.f32.mrb[0].mxu0
      %423 = vmatprep.mubr.f32.mxu0 0.0
      %424 = vmatmul.mubr.f32.gmra.mrb[0].mxu0 %v342
      %v425 = vpop.f32.mrb[0].mxu0
      %v426 = vadd.f32 %v329, %v425
      %v427 = vpop.f32.mrb[0].mxu0
      %428 = vdwg.mxu0
      %v429 = vmax.f32 %v411, 0.0
      %v430 = vmax.f32 %v416, 0.0
      %v431 = vmax.f32 %v421, 0.0
      %v432 = vmax.f32 %v426, 0.0
      %v433 = vld [vmem:[%s4] sm:$0xff]
      %v434 = vld [vmem:[%s4 + $0x8] sm:$0xff]
      %v435 = vld [vmem:[%s4 + $0x10] sm:$0xff]
      %v436 = vld [vmem:[%s4 + $0x18] sm:$0xff]
      %v437 = vld [vmem:[%s5] sm:$0x1]
      %v439 = vlaneseq
      %v440 = vshrl.u32 %v439, 7
      %v441 = vsub.s32 0, %v440
      %v442 = vrot.slane %v437, %v441
      %vm444 = vcmask 261120
      %v446 = vsel %vm444, %v429, 0
      %v449 = vsel %vm444, %v430, 0
      %v452 = vsel %vm444, %v431, 0
      %v455 = vsel %vm444, %v432, 0
      %457 = vmatprep.subr.mxu0 0.0
      %458 = vmatpush1.msra.mxu0 %v433
      %459 = vmatprep.subr.mxu0 0.0
      %460 = vmatpush1.msra.mxu0 %v434
      %461 = vmatprep.subr.mxu0 0.0
      %462 = vmatpush1.msra.mxu0 %v435
      %463 = vmatprep.subr.mxu0 0.0
      %464 = vmatpush1.msra.mxu0 %v436
      %465 = vmatprep.subr.mxu0 0.0
      %466 = vmatpush1.msra.mxu0 0.0
      %467 = vmatprep.subr.mxu0 0.0
      %468 = vmatpush1.msra.mxu0 0.0
      %469 = vmatprep.subr.mxu0 0.0
      %470 = vmatpush1.msra.mxu0 0.0
      %471 = vmatprep.subr.mxu0 0.0
      %472 = vmatpush1.msra.mxu0 0.0
      %473 = vmatprep.subr.mxu0 0.0
      %474 = vmatpush1.msra.mxu0 0.0
      %475 = vmatprep.subr.mxu0 0.0
      %476 = vmatpush1.msra.mxu0 0.0
      %477 = vmatprep.subr.mxu0 0.0
      %478 = vmatpush1.msra.mxu0 0.0
      %479 = vmatprep.subr.mxu0 0.0
      %480 = vmatpush1.msra.mxu0 0.0
      %481 = vmatprep.subr.mxu0 0.0
      %482 = vmatpush1.msra.mxu0 0.0
      %483 = vmatprep.subr.mxu0 0.0
      %484 = vmatpush1.msra.mxu0 0.0
      %485 = vmatprep.subr.mxu0 0.0
      %486 = vmatpush1.msra.mxu0 0.0
      %487 = vmatprep.subr.mxu0 0.0
      %488 = vmatpush1.msra.mxu0 0.0
      %489 = vmatprep.subr.mxu0 0.0
      %490 = vmatpush1.msra.mxu0 0.0
      %491 = vmatprep.subr.mxu0 0.0
      %492 = vmatpush1.msra.mxu0 0.0
      %493 = vmatprep.subr.mxu0 0.0
      %494 = vmatpush1.msra.mxu0 0.0
      %495 = vmatprep.subr.mxu0 0.0
      %496 = vmatpush1.msra.mxu0 0.0
      %497 = vmatprep.subr.mxu0 0.0
      %498 = vmatpush1.msra.mxu0 0.0
      %499 = vmatprep.subr.mxu0 0.0
      %500 = vmatpush1.msra.mxu0 0.0
      %501 = vmatprep.subr.mxu0 0.0
      %502 = vmatpush1.msra.mxu0 0.0
      %503 = vmatprep.subr.mxu0 0.0
      %504 = vmatpush1.msra.mxu0 0.0
      %505 = vmatprep.subr.mxu0 0.0
      %506 = vmatpush1.msra.mxu0 0.0
      %507 = vmatprep.subr.mxu0 0.0
      %508 = vmatpush1.msra.mxu0 0.0
      %509 = vmatprep.subr.mxu0 0.0
      %510 = vmatpush1.msra.mxu0 0.0
      %511 = vmatprep.subr.mxu0 0.0
      %512 = vmatpush1.msra.mxu0 0.0
      %513 = vmatprep.subr.mxu0 0.0
      %514 = vmatpush1.msra.mxu0 0.0
      %515 = vmatprep.subr.mxu0 0.0
      %516 = vmatpush1.msra.mxu0 0.0
      %517 = vmatprep.subr.mxu0 0.0
      %518 = vmatpush1.msra.mxu0 0.0
      %519 = vmatprep.subr.mxu0 0.0
      %520 = vmatpush1.msra.mxu0 0.0
      %521 = vmatprep.mubr.f32.mxu0 0.0
      %522 = vmatmul.mubr.f32.gmra.mrb[0].mxu0 %v446
      %v523 = vpop.f32.mrb[0].mxu0
      %v524 = vadd.f32 %v442, %v523
      %v525 = vpop.f32.mrb[0].mxu0
      %526 = vmatprep.mubr.f32.mxu0 0.0
      %527 = vmatmul.mubr.f32.gmra.mrb[0].mxu0 %v449
      %v528 = vpop.f32.mrb[0].mxu0
      %v529 = vadd.f32 %v442, %v528
      %v530 = vpop.f32.mrb[0].mxu0
      %531 = vmatprep.mubr.f32.mxu0 0.0
      %532 = vmatmul.mubr.f32.gmra.mrb[0].mxu0 %v452
      %v533 = vpop.f32.mrb[0].mxu0
      %v534 = vadd.f32 %v442, %v533
      %v535 = vpop.f32.mrb[0].mxu0
      %536 = vmatprep.mubr.f32.mxu0 0.0
      %537 = vmatmul.mubr.f32.gmra.mrb[0].mxu0 %v455
      %v538 = vpop.f32.mrb[0].mxu0
      %v539 = vadd.f32 %v442, %v538
      %v540 = vpop.f32.mrb[0].mxu0
      %541 = vdwg.mxu0
      %v542 = vmax.f32 %v524, 0.0
      %v543 = vmax.f32 %v529, 0.0
      %v544 = vmax.f32 %v534, 0.0
      %v545 = vmax.f32 %v539, 0.0
      %546 = vst.msk [vmem:[%s310] sm:$0xff] %vm444, %v542
      %547 = vst.msk [vmem:[%s310 + $0x8] sm:$0xff] %vm444, %v543
      %548 = vst.msk [vmem:[%s310 + $0x10] sm:$0xff] %vm444, %v544
      %549 = vst.msk [vmem:[%s310 + $0x18] sm:$0xff] %vm444, %v545
      %v550 = vld [vmem:[%s304] sm:$0xff]
      %v551 = vld [vmem:[%s304 + $0x8] sm:$0xff]
      %v552 = vld [vmem:[%s304 + $0x10] sm:$0xff]
      %v553 = vld [vmem:[%s304 + $0x18] sm:$0xff]
      %555 = vset.pattern.permute.xlu0 0
      %556 = vperm.xlu0 %555, %v550
      %v557 = vpop.permute.xlu0 %556
      %560 = vset.pattern.permute.xlu0 0
      %561 = vperm.xlu0 %560, %v551
      %v562 = vpop.permute.xlu0 %561
      %565 = vset.pattern.permute.xlu0 0
      %566 = vperm.xlu0 %565, %v552
      %v567 = vpop.permute.xlu0 %566
      %570 = vset.pattern.permute.xlu0 0
      %571 = vperm.xlu0 %570, %v553
      %v572 = vpop.permute.xlu0 %571
      %v574 = vmul.f32 %v557, %v542
      %v575 = vmul.f32 %v562, %v543
      %v576 = vmul.f32 %v567, %v544
      %v577 = vmul.f32 %v572, %v545
      %v578 = vpack.c.bf16 %v575, %v574
      %v579 = vpack.c.bf16 %v577, %v576
      %v582 = vunpack.c.l.b16 %v578
      %v583 = vunpack.c.h.b16 %v578
      %v584 = vunpack.c.l.b16 %v579
      %v585 = vunpack.c.h.b16 %v579
      %v586 = vpack.c.b16 %v582, %v582
      %v587 = vpack.c.b16 %v583, %v583
      %v588 = vpack.c.b16 %v584, %v584
      %v589 = vpack.c.b16 %v585, %v585
      %vm594 = vcmask 257024
      %595 = vst.msk [vmem:[%s316] sm:$0xf] %vm594, %v586
      %596 = vst.msk [vmem:[%s316 + $0x4] sm:$0xf] %vm594, %v587
      %597 = vst.msk [vmem:[%s316 + $0x8] sm:$0xf] %vm594, %v588
      %598 = vst.msk [vmem:[%s316 + $0xc] sm:$0xf] %vm594, %v589
      %s599 = smul.u32 4, %s19
      %p600 = scmp.lt.s32.totalorder %s599, 7
      %s601 = scalar_select %p600, %s599, 7
      %s602 = smul.addr %s601, 8
      %s603 = scalar_lea.vmem %s6, %s602
      %s604 = smul.u32 4, %s19
      %p605 = scmp.lt.s32.totalorder %s604, 7
      %s606 = scalar_select %p605, %s604, 7
      %s607 = smul.addr %s606, 4
      %s608 = scalar_lea.vmem %s7, %s607
      // Predicated region
      $region45: #{tpu_custom_call.1} parent=43 // pred_check
        %p609 = pneg %p173
      $region46: #{tpu_custom_call.1} parent=43 // pred_check_branch
        %611 = sbr.rel (%p609) target = $region48
      $region47: #{tpu_custom_call.1} parent=43 // pred_region
        %s612 = smul.u32 4, %s19
      $region48: #{tpu_custom_call.1} parent=43 // pred_fallthru
        _
      // Predicated region
      $region49: #{tpu_custom_call.1} parent=43 // pred_check
        %p613 = pneg %p199
      $region50: #{tpu_custom_call.1} parent=43 // pred_check_branch
        %615 = sbr.rel (%p613) target = $region52
      $region51: #{tpu_custom_call.1} parent=43 // pred_region
        %s616 = smul.u32 4, %s19
      $region52: #{tpu_custom_call.1} parent=43 // pred_fallthru
        _
    $region44: #{tpu_custom_call.1} parent=5 // pred_fallthru
      _
    %p617 = scmp.le.s32.totalorder 2, %s14
    // Predicated region
    $region53: #{tpu_custom_call.1} parent=5 // pred_check
      %p618 = pneg %p617
    $region54: #{tpu_custom_call.1} parent=5 // pred_check_branch
      %620 = sbr.rel (%p618) target = $region56
    $region55: #{tpu_custom_call.1} parent=5 // pred_region
      %s621 = ssub.s32 %s14, 2
      // Predicated region
      $region57: #{tpu_custom_call.1} parent=55 // pred_check
        %p622 = pneg %p179
      $region58: #{tpu_custom_call.1} parent=55 // pred_check_branch
        %624 = sbr.rel (%p622) target = $region60
      $region59: #{tpu_custom_call.1} parent=55 // pred_region
        %s625 = smul.u32 4, %s20
        %p626 = scmp.lt.s32.totalorder %s625, 7
        %s627 = scalar_select %p626, %s625, 7
        %s628 = smul.addr %s627, 8
        %s629 = scalar_lea.vmem %s6, %s628
      $region60: #{tpu_custom_call.1} parent=55 // pred_fallthru
        _
      // Predicated region
      $region61: #{tpu_custom_call.1} parent=55 // pred_check
        %p630 = pneg %p205
      $region62: #{tpu_custom_call.1} parent=55 // pred_check_branch
        %632 = sbr.rel (%p630) target = $region64
      $region63: #{tpu_custom_call.1} parent=55 // pred_region
        %s633 = smul.u32 4, %s20
        %p634 = scmp.lt.s32.totalorder %s633, 7
        %s635 = scalar_select %p634, %s633, 7
        %s636 = smul.addr %s635, 4
        %s637 = scalar_lea.vmem %s7, %s636
      $region64: #{tpu_custom_call.1} parent=55 // pred_fallthru
        _
    $region56: #{tpu_custom_call.1} parent=5 // pred_fallthru
      _
  $region6: #{tpu_custom_call.1} parent=0 // loop_footer
    %s18 = sadd.s32 1, %s14
  $region7: #{tpu_custom_call.1} parent=0 // loop_footer_branch
    %13 = sbr.rel target = $region3
  $region8: #{tpu_custom_call.1} parent=0 // loop_exit
    _

</llo_original>
